<compile_context>
chip_gen: v6e
topology: v6e:2x2x1
jax: 0.10.0
libtpu: 0.0.40
codegen_flags: <defaults>
</compile_context>

<pallas_src>
import functools

import jax
import jax.numpy as jnp
import numpy as np
from jax.experimental import pallas as pl
from jax.experimental.pallas import tpu as pltpu


def _round_up(x, m):
    return (x + m - 1) // m * m


# ---------------------------------------------------------------------------
# Kernel (batch on lanes)
# ---------------------------------------------------------------------------
def _qmix_kernel(S, A, E, off_sh, off_aq,
                 st_ref, aq_ref, w_ref, wv2_ref, bv2_ref, q_ref, x_ref):
    """One batch tile of QMIX mixing (everything transposed: batch on lanes).

    st_ref  : (S, TB)       states^T
    aq_ref  : (A, TB)       agent_qs^T
    w_ref   : (n_cat, K)    fused hypernet weights^T (+ bias row, + 0/1 block)
    wv2_ref : (E, 1)        V[2] weight (column layout)
    bv2_ref : (1, 1)        V[2] bias
    q_ref   : (1, TB)       q_tot, lane-dense
    x_ref   : (K, TB)       VMEM scratch for fused input [state ; q ; 1]^T
    """
    AE = A * E
    TB = st_ref.shape[1]

    # Stage fused input x^T = [state^T ; agent_qs^T ; 1] in VMEM (single MXU
    # operand; the constant-1 row folds all hypernet biases into the matmul).
    x_ref[0:S, :] = st_ref[...].astype(x_ref.dtype)
    x_ref[S:S + A, :] = aq_ref[...].astype(x_ref.dtype)
    x_ref[S + A:S + A + 1, :] = jnp.ones((1, TB), x_ref.dtype)

    # One fused MXU matmul: h^T = W_cat^T @ x^T   -> (n_cat, TB)
    h = jnp.dot(w_ref[...], x_ref[...], preferred_element_type=jnp.float32)

    # Segment slices: all sublane offsets are multiples of 8 -> no relayout.
    w1 = jnp.abs(h[0:AE, :])                                # |hyper_w_1|, agent-major
    b1 = h[off_sh:off_sh + E, :]                            # hyper_b_1
    wf = jnp.abs(h[off_sh + E:off_sh + 2 * E, :])           # |hyper_w_final|
    vh = jnp.maximum(h[off_sh + 2 * E:off_sh + 3 * E, :], 0.0)   # relu(V[0])
    aqb = h[off_aq:off_aq + AE, :]                          # agent_qs broadcast block

    # Mixing: hidden_pre[e] = sum_a aq[a] * |w1|[a, e]
    # One full-width VPU multiply + (A-1) sublane-sliced adds (free slices).
    t = aqb * w1                                            # (A*E, TB)
    mixed = t[0:E, :]
    for a in range(1, A):
        mixed = mixed + t[a * E:(a + 1) * E, :]
    hidden_pre = mixed + b1

    # ELU(alpha=1): exp only on the clamped negative branch (no overflow).
    hidden = jnp.where(hidden_pre > 0.0, hidden_pre,
                       jnp.exp(jnp.minimum(hidden_pre, 0.0)) - 1.0)

    # q_tot = <hidden, |w_final|> + (<relu(V0), w_v2> + b_v2)
    # Reduce over embed_dim (sublanes) -> result is already lane-dense (1, TB).
    m = hidden * wf + vh * wv2_ref[...]
    q_ref[...] = jnp.sum(m, axis=0, keepdims=True) + bv2_ref[...]


# ---------------------------------------------------------------------------
# Parameter packing (wrapper-side, one-time)
# ---------------------------------------------------------------------------
def pack_qmix_params(params, *, n_agents, embed_dim, state_dim,
                     dtype=jnp.float32):
    A, E, S = n_agents, embed_dim, state_dim
    AE = A * E

    off_sh = _round_up(AE, 128)                 # shared block: [b1 | w_final | V0]
    off_aq = _round_up(off_sh + 3 * E, 128)     # agent_qs lane-broadcast block
    n_cat = _round_up(off_aq + AE, 128)
    K = S + A + 1                               # [state | agent_qs | 1(bias)]

    w = np.zeros((K, n_cat), np.float32)
    w[:S, 0:AE] = np.asarray(params["w_w1"])
    w[:S, off_sh:off_sh + E] = np.asarray(params["w_b1"])
    w[:S, off_sh + E:off_sh + 2 * E] = np.asarray(params["w_wf"])
    w[:S, off_sh + 2 * E:off_sh + 3 * E] = np.asarray(params["w_v1"])

    # Bias row (multiplied by the constant-1 input row -> bias folded into MXU).
    r = S + A
    w[r, 0:AE] = np.asarray(params["b_w1"]).reshape(-1)
    w[r, off_sh:off_sh + E] = np.asarray(params["b_b1"]).reshape(-1)
    w[r, off_sh + E:off_sh + 2 * E] = np.asarray(params["b_wf"]).reshape(-1)
    w[r, off_sh + 2 * E:off_sh + 3 * E] = np.asarray(params["b_v1"]).reshape(-1)

    # 0/1 selection block: routes agent q_a to rows [off_aq + a*E, +E) of h^T.
    for a in range(A):
        w[S + a, off_aq + a * E: off_aq + (a + 1) * E] = 1.0

    w_t = np.ascontiguousarray(w.T)                                   # (n_cat, K)
    wv2_col = np.asarray(params["w_v2"]).reshape(E, 1).astype(np.float32)
    bv2 = np.asarray(params["b_v2"]).reshape(1, 1).astype(np.float32)

    return (jnp.asarray(w_t, dtype=dtype), jnp.asarray(wv2_col),
            jnp.asarray(bv2), (off_sh, off_aq), n_cat, K)


# ---------------------------------------------------------------------------
# Batch-tile selection
# ---------------------------------------------------------------------------
def _choose_tile(B, block_batch):
    """Pick the lane-width of a batch tile (multiple of 128 when multi-tile)."""
    B8 = _round_up(max(B, 8), 8)
    if B8 <= 384:                                 # tiny: one full-width tile
        return B8
    cap = max(128, (min(block_batch, B8) // 128) * 128)
    n_tiles = max(2, pl.cdiv(B, cap))             # >=2 tiles so both v7x TCs work
    return 128 * pl.cdiv(B, 128 * n_tiles)


# ---------------------------------------------------------------------------
# Forward wrapper
# ---------------------------------------------------------------------------
def qmix_forward(agent_qs, states, params, *, n_agents, embed_dim,
                 block_batch=2048, matmul_dtype=jnp.float32,
                 vmem_limit_bytes=32 * 1024 * 1024):
    """agent_qs: (bs, T, n_agents), states: (bs, T, state_dim) -> (bs, T, 1)."""
    bs, T, _ = agent_qs.shape
    state_dim = states.shape[-1]
    A, E, S = n_agents, embed_dim, state_dim
    B = bs * T

    w_cat_t, wv2_col, bv2, (off_sh, off_aq), n_cat, K = pack_qmix_params(
        params, n_agents=A, embed_dim=E, state_dim=S, dtype=matmul_dtype)

    # Batch-on-lanes operands.  No HBM materialization of the fused input:
    # the kernel stages [state^T ; q^T ; 1] into a VMEM scratch itself.
    st_t = states.reshape(B, S).T.astype(matmul_dtype)      # (S, B)
    aq_t = agent_qs.reshape(B, A).T.astype(matmul_dtype)    # (A, B)

    TB = _choose_tile(B, block_batch)
    B_pad = _round_up(B, TB)
    if B_pad != B:
        st_t = jnp.pad(st_t, ((0, 0), (0, B_pad - B)))
        aq_t = jnp.pad(aq_t, ((0, 0), (0, B_pad - B)))
    G = B_pad // TB

    kernel = functools.partial(_qmix_kernel, S, A, E, off_sh, off_aq)

    q = pl.pallas_call(
        kernel,
        out_shape=jax.ShapeDtypeStruct((G, TB), jnp.float32),
        grid=(G,),
        in_specs=[
            pl.BlockSpec((S, TB), lambda i: (0, i)),       # states^T, tiled over batch
            pl.BlockSpec((A, TB), lambda i: (0, i)),       # agent_qs^T
            pl.BlockSpec((n_cat, K), lambda i: (0, 0)),    # fused W^T: VMEM-resident
            pl.BlockSpec((E, 1), lambda i: (0, 0)),        # V[2] weight column
            pl.BlockSpec((1, 1), lambda i: (0, 0)),        # V[2] bias
        ],
        out_specs=pl.BlockSpec((1, TB), lambda i: (i, 0)),  # lane-dense q row
        scratch_shapes=[pltpu.VMEM((K, TB), matmul_dtype)],
        compiler_params=pltpu.CompilerParams(
            dimension_semantics=("parallel",),
            vmem_limit_bytes=vmem_limit_bytes),
    )(st_t, aq_t, w_cat_t, wv2_col, bv2)

    return q.reshape(B_pad)[:B].reshape(bs, T, 1)


# ---------------------------------------------------------------------------
# Synthetic params + pure-JAX reference
# ---------------------------------------------------------------------------
def make_params(key, state_dim, n_agents, embed_dim):
    """Deterministic synthetic parameters (nn.Linear shapes, stored transposed)."""
    keys = jax.random.split(key, 10)

    def lin(kw, kb, fan_in, fan_out):
        lim = 1.0 / np.sqrt(fan_in)
        w = jax.random.uniform(kw, (fan_in, fan_out), jnp.float32, -lim, lim)
        b = jax.random.uniform(kb, (1, fan_out), jnp.float32, -lim, lim)
        return w, b

    w_w1, b_w1 = lin(keys[0], keys[1], state_dim, embed_dim * n_agents)  # hyper_w_1
    w_b1, b_b1 = lin(keys[2], keys[3], state_dim, embed_dim)             # hyper_b_1
    w_wf, b_wf = lin(keys[4], keys[5], state_dim, embed_dim)             # hyper_w_final
    w_v1, b_v1 = lin(keys[6], keys[7], state_dim, embed_dim)             # V[0]
    w_v2, b_v2 = lin(keys[8], keys[9], embed_dim, 1)                     # V[2]
    return dict(w_w1=w_w1, b_w1=b_w1, w_b1=w_b1, b_b1=b_b1,
                w_wf=w_wf, b_wf=b_wf, w_v1=w_v1, b_v1=b_v1,
                w_v2=w_v2, b_v2=b_v2)


def qmix_reference(agent_qs, states, p, *, n_agents, embed_dim):
    """Pure-JAX reference mirroring the PyTorch forward exactly."""
    bs = agent_qs.shape[0]
    state_dim = states.shape[-1]
    s = states.reshape(-1, state_dim)
    aq = agent_qs.reshape(-1, 1, n_agents)
    w1 = jnp.abs(s @ p["w_w1"] + p["b_w1"]).reshape(-1, n_agents, embed_dim)
    b1 = (s @ p["w_b1"] + p["b_b1"]).reshape(-1, 1, embed_dim)
    h = jax.nn.elu(jnp.matmul(aq, w1) + b1)
    wf = jnp.abs(s @ p["w_wf"] + p["b_wf"]).reshape(-1, embed_dim, 1)
    v = (jnp.maximum(s @ p["w_v1"] + p["b_v1"], 0.0) @ p["w_v2"]
         + p["b_v2"]).reshape(-1, 1, 1)
    y = jnp.matmul(h, wf) + v
    return y.reshape(bs, -1, 1)


if __name__ == "__main__":
    n_agents, state_dim, embed_dim = 8, 32, 32

    key = jax.random.PRNGKey(0)
    k_p, k1, k2, k3, k4 = jax.random.split(key, 5)
    params = make_params(k_p, state_dim, n_agents, embed_dim)

    # --- test 1: small batch, single tile --------------------------------
    bs, T = 2, 4
    aq1 = jax.random.normal(k1, (bs, T, n_agents), jnp.float32)
    st1 = jax.random.normal(k2, (bs, T, state_dim), jnp.float32)
    out1 = jax.block_until_ready(
        qmix_forward(aq1, st1, params, n_agents=n_agents, embed_dim=embed_dim))
    with jax.default_matmul_precision("highest"):
        ref1 = qmix_reference(aq1, st1, params,
                              n_agents=n_agents, embed_dim=embed_dim)
    assert out1.shape == (bs, T, 1)
    np.testing.assert_allclose(np.asarray(out1), np.asarray(ref1),
                               rtol=2e-3, atol=2e-3)

    # --- test 2: multi-tile grid with batch padding (B=400 -> 4 tiles of 128)
    bs2, T2 = 4, 100
    aq2 = jax.random.normal(k3, (bs2, T2, n_agents), jnp.float32)
    st2 = jax.random.normal(k4, (bs2, T2, state_dim), jnp.float32)
    out2 = jax.block_until_ready(
        qmix_forward(aq2, st2, params, n_agents=n_agents, embed_dim=embed_dim,
                     block_batch=128))
    with jax.default_matmul_precision("highest"):
        ref2 = qmix_reference(aq2, st2, params,
                              n_agents=n_agents, embed_dim=embed_dim)
    np.testing.assert_allclose(np.asarray(out2), np.asarray(ref2),
                               rtol=2e-3, atol=2e-3)

    print("KERNEL_OK")
</pallas_src>

<mosaic_0001>
module attributes {stable_mosaic.version = 11 : i64} {
  func.func @_qmix_kernel(%arg0: i32, %arg1: memref<32x8xf32, #tpu.memory_space<vmem>>, %arg2: memref<8x8xf32, #tpu.memory_space<vmem>>, %arg3: memref<640x41xf32, #tpu.memory_space<vmem>>, %arg4: memref<32x1xf32, #tpu.memory_space<vmem>>, %arg5: memref<1x1xf32, #tpu.memory_space<vmem>>, %arg6: memref<1x8xf32, #tpu.memory_space<vmem>>, %arg7: memref<41x8xf32, #tpu.memory_space<vmem>>) attributes {dimension_semantics = [#tpu.dimension_semantics<parallel>], iteration_bounds = array<i64: 1>, scalar_prefetch = 0 : i64, scratch_operands = 1 : i64, tpu.core_type = #tpu.core_type<tc>, window_params = [{transform_indices = @transform_0, window_bounds = array<i64: 32, 8>}, {transform_indices = @transform_1, window_bounds = array<i64: 8, 8>}, {pipeline_mode = #tpu.pipeline_mode<synchronous>, transform_indices = @transform_2, window_bounds = array<i64: 640, 41>}, {pipeline_mode = #tpu.pipeline_mode<synchronous>, transform_indices = @transform_3, window_bounds = array<i64: 32, 1>}, {pipeline_mode = #tpu.pipeline_mode<synchronous>, transform_indices = @transform_4, window_bounds = array<i64: 1, 1>}, {transform_indices = @transform_5, window_bounds = array<i64: 1, 8>}]} {
    %c0 = arith.constant 0 : index
    %c0_0 = arith.constant 0 : index
    %0 = vector.load %arg1[%c0, %c0_0] : memref<32x8xf32, #tpu.memory_space<vmem>>, vector<32x8xf32>
    %c0_1 = arith.constant 0 : index
    %c0_2 = arith.constant 0 : index
    %1 = vector.load %arg7[%c0_1, %c0_2] : memref<41x8xf32, #tpu.memory_space<vmem>>, vector<32x8xf32>
    tpu.vector_store %arg7[%c0_1, %c0_2], %0 {strides = array<i32>} : memref<41x8xf32, #tpu.memory_space<vmem>>, vector<32x8xf32>,
    %c0_3 = arith.constant 0 : index
    %c0_4 = arith.constant 0 : index
    %2 = vector.load %arg2[%c0_3, %c0_4] : memref<8x8xf32, #tpu.memory_space<vmem>>, vector<8x8xf32>
    %c32 = arith.constant 32 : index
    %c0_5 = arith.constant 0 : index
    %3 = vector.load %arg7[%c32, %c0_5] : memref<41x8xf32, #tpu.memory_space<vmem>>, vector<8x8xf32>
    tpu.vector_store %arg7[%c32, %c0_5], %2 {strides = array<i32>} : memref<41x8xf32, #tpu.memory_space<vmem>>, vector<8x8xf32>,
    %cst = arith.constant 1.000000e+00 : f32
    %4 = vector.broadcast %cst : f32 to vector<1x8xf32>
    %c40 = arith.constant 40 : index
    %c0_6 = arith.constant 0 : index
    %5 = vector.load %arg7[%c40, %c0_6] : memref<41x8xf32, #tpu.memory_space<vmem>>, vector<1x8xf32>
    tpu.vector_store %arg7[%c40, %c0_6], %4 {strides = array<i32>} : memref<41x8xf32, #tpu.memory_space<vmem>>, vector<1x8xf32>,
    %c0_7 = arith.constant 0 : index
    %c0_8 = arith.constant 0 : index
    %6 = vector.load %arg3[%c0_7, %c0_8] : memref<640x41xf32, #tpu.memory_space<vmem>>, vector<640x41xf32>
    %c0_9 = arith.constant 0 : index
    %c0_10 = arith.constant 0 : index
    %7 = vector.load %arg7[%c0_9, %c0_10] : memref<41x8xf32, #tpu.memory_space<vmem>>, vector<41x8xf32>
    %cst_11 = arith.constant dense<0.000000e+00> : vector<640x8xf32>
    %8 = tpu.matmul %6, %7, %cst_11 {dimension_numbers = #tpu.dot_dimension_numbers<[1], [0], [0], [1], [0, 0, 1, 1], [], []>} : vector<640x41xf32>, vector<41x8xf32>, vector<640x8xf32> -> vector<640x8xf32>
    %9 = vector.extract_strided_slice %8 {offsets = [0, 0], sizes = [256, 8], strides = [1, 1]} : vector<640x8xf32> to vector<256x8xf32>
    %10 = math.absf %9 : vector<256x8xf32>
    %11 = vector.extract_strided_slice %8 {offsets = [256, 0], sizes = [32, 8], strides = [1, 1]} : vector<640x8xf32> to vector<32x8xf32>
    %12 = vector.extract_strided_slice %8 {offsets = [288, 0], sizes = [32, 8], strides = [1, 1]} : vector<640x8xf32> to vector<32x8xf32>
    %13 = math.absf %12 : vector<32x8xf32>
    %14 = vector.extract_strided_slice %8 {offsets = [320, 0], sizes = [32, 8], strides = [1, 1]} : vector<640x8xf32> to vector<32x8xf32>
    %cst_12 = arith.constant 0.000000e+00 : f32
    %15 = vector.broadcast %cst_12 : f32 to vector<32x8xf32>
    %16 = arith.maximumf %14, %15 : vector<32x8xf32>
    %17 = vector.extract_strided_slice %8 {offsets = [384, 0], sizes = [256, 8], strides = [1, 1]} : vector<640x8xf32> to vector<256x8xf32>
    %18 = arith.mulf %17, %10 : vector<256x8xf32>
    %19 = vector.extract_strided_slice %18 {offsets = [0, 0], sizes = [32, 8], strides = [1, 1]} : vector<256x8xf32> to vector<32x8xf32>
    %20 = vector.extract_strided_slice %18 {offsets = [32, 0], sizes = [32, 8], strides = [1, 1]} : vector<256x8xf32> to vector<32x8xf32>
    %21 = arith.addf %19, %20 : vector<32x8xf32>
    %22 = vector.extract_strided_slice %18 {offsets = [64, 0], sizes = [32, 8], strides = [1, 1]} : vector<256x8xf32> to vector<32x8xf32>
    %23 = arith.addf %21, %22 : vector<32x8xf32>
    %24 = vector.extract_strided_slice %18 {offsets = [96, 0], sizes = [32, 8], strides = [1, 1]} : vector<256x8xf32> to vector<32x8xf32>
    %25 = arith.addf %23, %24 : vector<32x8xf32>
    %26 = vector.extract_strided_slice %18 {offsets = [128, 0], sizes = [32, 8], strides = [1, 1]} : vector<256x8xf32> to vector<32x8xf32>
    %27 = arith.addf %25, %26 : vector<32x8xf32>
    %28 = vector.extract_strided_slice %18 {offsets = [160, 0], sizes = [32, 8], strides = [1, 1]} : vector<256x8xf32> to vector<32x8xf32>
    %29 = arith.addf %27, %28 : vector<32x8xf32>
    %30 = vector.extract_strided_slice %18 {offsets = [192, 0], sizes = [32, 8], strides = [1, 1]} : vector<256x8xf32> to vector<32x8xf32>
    %31 = arith.addf %29, %30 : vector<32x8xf32>
    %32 = vector.extract_strided_slice %18 {offsets = [224, 0], sizes = [32, 8], strides = [1, 1]} : vector<256x8xf32> to vector<32x8xf32>
    %33 = arith.addf %31, %32 : vector<32x8xf32>
    %34 = arith.addf %33, %11 : vector<32x8xf32>
    %cst_13 = arith.constant 0.000000e+00 : f32
    %35 = vector.broadcast %cst_13 : f32 to vector<32x8xf32>
    %36 = arith.cmpf ogt, %34, %35 : vector<32x8xf32>
    %cst_14 = arith.constant 0.000000e+00 : f32
    %37 = vector.broadcast %cst_14 : f32 to vector<32x8xf32>
    %38 = arith.minimumf %34, %37 : vector<32x8xf32>
    %39 = math.exp %38 : vector<32x8xf32>
    %cst_15 = arith.constant 1.000000e+00 : f32
    %40 = vector.broadcast %cst_15 : f32 to vector<32x8xf32>
    %41 = arith.subf %39, %40 : vector<32x8xf32>
    %42 = arith.select %36, %34, %41 : vector<32x8xi1>, vector<32x8xf32>
    %43 = arith.mulf %42, %13 : vector<32x8xf32>
    %c0_16 = arith.constant 0 : index
    %c0_17 = arith.constant 0 : index
    %44 = vector.load %arg4[%c0_16, %c0_17] : memref<32x1xf32, #tpu.memory_space<vmem>>, vector<32x1xf32>
    %45 = vector.broadcast %44 : vector<32x1xf32> to vector<32x8xf32>
    %46 = arith.mulf %16, %45 : vector<32x8xf32>
    %47 = arith.addf %43, %46 : vector<32x8xf32>
    %cst_18 = arith.constant dense<0.000000e+00> : vector<8xf32>
    %48 = vector.multi_reduction <add>, %47, %cst_18 [0] : vector<32x8xf32> to vector<8xf32>
    %49 = vector.shape_cast %48 : vector<8xf32> to vector<1x8xf32>
    %c0_19 = arith.constant 0 : index
    %c0_20 = arith.constant 0 : index
    %50 = vector.load %arg5[%c0_19, %c0_20] : memref<1x1xf32, #tpu.memory_space<vmem>>, vector<1x1xf32>
    %51 = vector.broadcast %50 : vector<1x1xf32> to vector<1x8xf32>
    %52 = arith.addf %49, %51 : vector<1x8xf32>
    %c0_21 = arith.constant 0 : index
    %c0_22 = arith.constant 0 : index
    %53 = vector.load %arg6[%c0_21, %c0_22] : memref<1x8xf32, #tpu.memory_space<vmem>>, vector<1x8xf32>
    tpu.vector_store %arg6[%c0_21, %c0_22], %52 {strides = array<i32>} : memref<1x8xf32, #tpu.memory_space<vmem>>, vector<1x8xf32>,
    return
  }
  func.func @transform_0(%arg0: i32) -> (i32, i32) {
    %c0_i32 = arith.constant 0 : i32
    %c0_i32_0 = arith.constant 0 : i32
    return %c0_i32, %arg0 : i32, i32
  }
  func.func @transform_1(%arg0: i32) -> (i32, i32) {
    %c0_i32 = arith.constant 0 : i32
    %c0_i32_0 = arith.constant 0 : i32
    return %c0_i32, %arg0 : i32, i32
  }
  func.func @transform_2(%arg0: i32) -> (i32, i32) {
    %c0_i32 = arith.constant 0 : i32
    %c0_i32_0 = arith.constant 0 : i32
    %c0_i32_1 = arith.constant 0 : i32
    return %c0_i32, %c0_i32_0 : i32, i32
  }
  func.func @transform_3(%arg0: i32) -> (i32, i32) {
    %c0_i32 = arith.constant 0 : i32
    %c0_i32_0 = arith.constant 0 : i32
    %c0_i32_1 = arith.constant 0 : i32
    return %c0_i32, %c0_i32_0 : i32, i32
  }
  func.func @transform_4(%arg0: i32) -> (i32, i32) {
    %c0_i32 = arith.constant 0 : i32
    %c0_i32_0 = arith.constant 0 : i32
    %c0_i32_1 = arith.constant 0 : i32
    return %c0_i32, %c0_i32_0 : i32, i32
  }
  func.func @transform_5(%arg0: i32) -> (i32, i32) {
    %c0_i32 = arith.constant 0 : i32
    %c0_i32_0 = arith.constant 0 : i32
    return %arg0, %c0_i32 : i32, i32
  }
}

</mosaic_0001>

<llo_original>
// kernel: tpu_custom_call.1
$region0: #{tpu_custom_call.1}
  #allocation0 [shape = 'u32[]', space=smem, size = 0x4, offset = 0x4, fixed_abs, tag = 'smem constant byte address 0x4 - core index']
  #allocation1 [shape = 'u32[144,128]{1,0:T(1,128)}', space=vmem, size = 0x12000, scoped, tag = 'internal scratch']
  #allocation2 [shape = 'f32[41,8]{1,0:T(8,128)}', space=vmem, size = 0x6000, scoped, tag = 'scratch operand']
  #allocation3 [shape = 'f32[1,1]{1,0:T(1,128)S(1)}', space=vmem, size = 0x200, scoped, tag = 'scoped memory for tpu_custom_call.1']
  %s0 = inlined_call_operand.vmem [shape: f32[32,8], index: 0, kind: input, shape index: {}]
  %s1 = inlined_call_operand.vmem [shape: f32[8,8], index: 1, kind: input, shape index: {}]
  %s2 = inlined_call_operand.vmem [shape: f32[640,41], index: 2, kind: input, shape index: {}]
  %s3 = inlined_call_operand.vmem [shape: f32[32,1], index: 3, kind: input, shape index: {}]
  %s4 = inlined_call_operand.<no memory space> [shape: f32[1,1], index: 4, kind: input, shape index: {}]
  %s5 = inlined_call_operand.hbm [shape: f32[1,8], index: 5, kind: output, shape index: {}]
  %s6 = sld [smem:[#allocation0]]
  $region30: #{tpu_custom_call.1} parent=0
    _
  %s8 = ssub.s32 1, %s6
  %s9 = scalar_select 0, %s8, %s6
  %v10 = vstv %s4
  %11 = vst [vmem:[#allocation3] sm:$0x1] %v10
  $region1: #{tpu_custom_call.1} parent=0
    #allocation4 [shape = 'u8[512]{0}', space=vmem, size = 0x400, scoped, tag = 'output window, operand 0, single buffered']
    #allocation5 [shape = 's32[1]{0}', space=sflag, size = 0x4, scoped, tag = 'scoped memory for tpu_custom_call.1']
    %12 = vsyncpa [#allocation5], 0
    // Predicated region
    $region2: #{tpu_custom_call.1} parent=1 // pred_check
      _
    $region3: #{tpu_custom_call.1} parent=1 // pred_check_branch
      %14 = sbr.rel (0) target = $region5
    $region4: #{tpu_custom_call.1} parent=1 // pred_region
      _
    $region5: #{tpu_custom_call.1} parent=1 // pred_fallthru
      _
    // Predicated region
    $region6: #{tpu_custom_call.1} parent=1 // pred_check
      _
    $region7: #{tpu_custom_call.1} parent=1 // pred_check_branch
      %16 = sbr.rel (0) target = $region9
    $region8: #{tpu_custom_call.1} parent=1 // pred_region
      _
    $region9: #{tpu_custom_call.1} parent=1 // pred_fallthru
      _
    // Predicated region
    $region10: #{tpu_custom_call.1} parent=1 // pred_check
      _
    $region11: #{tpu_custom_call.1} parent=1 // pred_check_branch
      %18 = sbr.rel (0) target = $region13
    $region12: #{tpu_custom_call.1} parent=1 // pred_region
      _
    $region13: #{tpu_custom_call.1} parent=1 // pred_fallthru
      _
    // Predicated region
    $region14: #{tpu_custom_call.1} parent=1 // pred_check
      _
    $region15: #{tpu_custom_call.1} parent=1 // pred_check_branch
      %20 = sbr.rel (0) target = $region17
    $region16: #{tpu_custom_call.1} parent=1 // pred_region
      _
    $region17: #{tpu_custom_call.1} parent=1 // pred_fallthru
      _
    // Predicated region
    $region18: #{tpu_custom_call.1} parent=1 // pred_check
      _
    $region19: #{tpu_custom_call.1} parent=1 // pred_check_branch
      %22 = sbr.rel (0) target = $region21
    $region20: #{tpu_custom_call.1} parent=1 // pred_region
      _
    $region21: #{tpu_custom_call.1} parent=1 // pred_fallthru
      _
    %v23 = vld [vmem:[%s0] sm:$0xff]
    %v24 = vld [vmem:[%s0 + $0x8] sm:$0xff]
    %v25 = vld [vmem:[%s0 + $0x10] sm:$0xff]
    %v26 = vld [vmem:[%s0 + $0x18] sm:$0xff]
    %vm27 = vcmask 64512
    %28 = vst.msk [vmem:[#allocation2] sm:$0xff] %vm27, %v23
    %29 = vst.msk [vmem:[#allocation2 + $0x8] sm:$0xff] %vm27, %v24
    %30 = vst.msk [vmem:[#allocation2 + $0x10] sm:$0xff] %vm27, %v25
    %31 = vst.msk [vmem:[#allocation2 + $0x18] sm:$0xff] %vm27, %v26
    %v32 = vld [vmem:[%s1] sm:$0xff]
    %33 = vst.msk [vmem:[#allocation2 + $0x20] sm:$0xff] %vm27, %v32
    %vm34 = vcmask 57344
    %35 = vst.msk [vmem:[#allocation2 + $0x28] sm:$0x1] %vm34, 1.0
    %v36 = vld [vmem:[%s2] sm:$0xff]
    %v37 = vld [vmem:[%s2 + $0x8] sm:$0xff]
    %v38 = vld [vmem:[%s2 + $0x10] sm:$0xff]
    %v39 = vld [vmem:[%s2 + $0x18] sm:$0xff]
    %v40 = vld [vmem:[%s2 + $0x20] sm:$0xff]
    %v41 = vld [vmem:[%s2 + $0x28] sm:$0xff]
    %v42 = vld [vmem:[%s2 + $0x30] sm:$0xff]
    %v43 = vld [vmem:[%s2 + $0x38] sm:$0xff]
    %v44 = vld [vmem:[%s2 + $0x40] sm:$0xff]
    %v45 = vld [vmem:[%s2 + $0x48] sm:$0xff]
    %v46 = vld [vmem:[%s2 + $0x50] sm:$0xff]
    %v47 = vld [vmem:[%s2 + $0x58] sm:$0xff]
    %v48 = vld [vmem:[%s2 + $0x60] sm:$0xff]
    %v49 = vld [vmem:[%s2 + $0x68] sm:$0xff]
    %v50 = vld [vmem:[%s2 + $0x70] sm:$0xff]
    %v51 = vld [vmem:[%s2 + $0x78] sm:$0xff]
    %v52 = vld [vmem:[%s2 + $0x80] sm:$0xff]
    %v53 = vld [vmem:[%s2 + $0x88] sm:$0xff]
    %v54 = vld [vmem:[%s2 + $0x90] sm:$0xff]
    %v55 = vld [vmem:[%s2 + $0x98] sm:$0xff]
    %v56 = vld [vmem:[%s2 + $0xa0] sm:$0xff]
    %v57 = vld [vmem:[%s2 + $0xa8] sm:$0xff]
    %v58 = vld [vmem:[%s2 + $0xb0] sm:$0xff]
    %v59 = vld [vmem:[%s2 + $0xb8] sm:$0xff]
    %v60 = vld [vmem:[%s2 + $0xc0] sm:$0xff]
    %v61 = vld [vmem:[%s2 + $0xc8] sm:$0xff]
    %v62 = vld [vmem:[%s2 + $0xd0] sm:$0xff]
    %v63 = vld [vmem:[%s2 + $0xd8] sm:$0xff]
    %v64 = vld [vmem:[%s2 + $0xe0] sm:$0xff]
    %v65 = vld [vmem:[%s2 + $0xe8] sm:$0xff]
    %v66 = vld [vmem:[%s2 + $0xf0] sm:$0xff]
    %v67 = vld [vmem:[%s2 + $0xf8] sm:$0xff]
    %v68 = vld [vmem:[%s2 + $0x100] sm:$0xff]
    %v69 = vld [vmem:[%s2 + $0x108] sm:$0xff]
    %v70 = vld [vmem:[%s2 + $0x110] sm:$0xff]
    %v71 = vld [vmem:[%s2 + $0x118] sm:$0xff]
    %v72 = vld [vmem:[%s2 + $0x120] sm:$0xff]
    %v73 = vld [vmem:[%s2 + $0x128] sm:$0xff]
    %v74 = vld [vmem:[%s2 + $0x130] sm:$0xff]
    %v75 = vld [vmem:[%s2 + $0x138] sm:$0xff]
    %v76 = vld [vmem:[%s2 + $0x140] sm:$0xff]
    %v77 = vld [vmem:[%s2 + $0x148] sm:$0xff]
    %v78 = vld [vmem:[%s2 + $0x150] sm:$0xff]
    %v79 = vld [vmem:[%s2 + $0x158] sm:$0xff]
    %v80 = vld [vmem:[%s2 + $0x160] sm:$0xff]
    %v81 = vld [vmem:[%s2 + $0x168] sm:$0xff]
    %v82 = vld [vmem:[%s2 + $0x170] sm:$0xff]
    %v83 = vld [vmem:[%s2 + $0x178] sm:$0xff]
    %v84 = vld [vmem:[%s2 + $0x180] sm:$0xff]
    %v85 = vld [vmem:[%s2 + $0x188] sm:$0xff]
    %v86 = vld [vmem:[%s2 + $0x190] sm:$0xff]
    %v87 = vld [vmem:[%s2 + $0x198] sm:$0xff]
    %v88 = vld [vmem:[%s2 + $0x1a0] sm:$0xff]
    %v89 = vld [vmem:[%s2 + $0x1a8] sm:$0xff]
    %v90 = vld [vmem:[%s2 + $0x1b0] sm:$0xff]
    %v91 = vld [vmem:[%s2 + $0x1b8] sm:$0xff]
    %v92 = vld [vmem:[%s2 + $0x1c0] sm:$0xff]
    %v93 = vld [vmem:[%s2 + $0x1c8] sm:$0xff]
    %v94 = vld [vmem:[%s2 + $0x1d0] sm:$0xff]
    %v95 = vld [vmem:[%s2 + $0x1d8] sm:$0xff]
    %v96 = vld [vmem:[%s2 + $0x1e0] sm:$0xff]
    %v97 = vld [vmem:[%s2 + $0x1e8] sm:$0xff]
    %v98 = vld [vmem:[%s2 + $0x1f0] sm:$0xff]
    %v99 = vld [vmem:[%s2 + $0x1f8] sm:$0xff]
    %v100 = vld [vmem:[%s2 + $0x200] sm:$0xff]
    %v101 = vld [vmem:[%s2 + $0x208] sm:$0xff]
    %v102 = vld [vmem:[%s2 + $0x210] sm:$0xff]
    %v103 = vld [vmem:[%s2 + $0x218] sm:$0xff]
    %v104 = vld [vmem:[%s2 + $0x220] sm:$0xff]
    %v105 = vld [vmem:[%s2 + $0x228] sm:$0xff]
    %v106 = vld [vmem:[%s2 + $0x230] sm:$0xff]
    %v107 = vld [vmem:[%s2 + $0x238] sm:$0xff]
    %v108 = vld [vmem:[%s2 + $0x240] sm:$0xff]
    %v109 = vld [vmem:[%s2 + $0x248] sm:$0xff]
    %v110 = vld [vmem:[%s2 + $0x250] sm:$0xff]
    %v111 = vld [vmem:[%s2 + $0x258] sm:$0xff]
    %v112 = vld [vmem:[%s2 + $0x260] sm:$0xff]
    %v113 = vld [vmem:[%s2 + $0x268] sm:$0xff]
    %v114 = vld [vmem:[%s2 + $0x270] sm:$0xff]
    %v115 = vld [vmem:[%s2 + $0x278] sm:$0xff]
    %v116 = vld [vmem:[#allocation2] sm:$0xff]
    %v117 = vld [vmem:[#allocation2 + $0x8] sm:$0xff]
    %v118 = vld [vmem:[#allocation2 + $0x10] sm:$0xff]
    %v119 = vld [vmem:[#allocation2 + $0x18] sm:$0xff]
    %v120 = vld [vmem:[#allocation2 + $0x20] sm:$0xff]
    %v121 = vld [vmem:[#allocation2 + $0x28] sm:$0x1]
    %vm122 = vcmask 334848
    %v124 = vsel %vm122, %v36, 0
    %v127 = vsel %vm122, %v37, 0
    %v130 = vsel %vm122, %v38, 0
    %v133 = vsel %vm122, %v39, 0
    %v136 = vsel %vm122, %v40, 0
    %v139 = vsel %vm122, %v41, 0
    %v142 = vsel %vm122, %v42, 0
    %v145 = vsel %vm122, %v43, 0
    %v148 = vsel %vm122, %v44, 0
    %v151 = vsel %vm122, %v45, 0
    %v154 = vsel %vm122, %v46, 0
    %v157 = vsel %vm122, %v47, 0
    %v160 = vsel %vm122, %v48, 0
    %v163 = vsel %vm122, %v49, 0
    %v166 = vsel %vm122, %v50, 0
    %v169 = vsel %vm122, %v51, 0
    %v172 = vsel %vm122, %v52, 0
    %v175 = vsel %vm122, %v53, 0
    %v178 = vsel %vm122, %v54, 0
    %v181 = vsel %vm122, %v55, 0
    %v184 = vsel %vm122, %v56, 0
    %v187 = vsel %vm122, %v57, 0
    %v190 = vsel %vm122, %v58, 0
    %v193 = vsel %vm122, %v59, 0
    %v196 = vsel %vm122, %v60, 0
    %v199 = vsel %vm122, %v61, 0
    %v202 = vsel %vm122, %v62, 0
    %v205 = vsel %vm122, %v63, 0
    %v208 = vsel %vm122, %v64, 0
    %v211 = vsel %vm122, %v65, 0
    %v214 = vsel %vm122, %v66, 0
    %v217 = vsel %vm122, %v67, 0
    %v220 = vsel %vm122, %v68, 0
    %v223 = vsel %vm122, %v69, 0
    %v226 = vsel %vm122, %v70, 0
    %v229 = vsel %vm122, %v71, 0
    %v232 = vsel %vm122, %v72, 0
    %v235 = vsel %vm122, %v73, 0
    %v238 = vsel %vm122, %v74, 0
    %v241 = vsel %vm122, %v75, 0
    %v244 = vsel %vm122, %v76, 0
    %v247 = vsel %vm122, %v77, 0
    %v250 = vsel %vm122, %v78, 0
    %v253 = vsel %vm122, %v79, 0
    %v256 = vsel %vm122, %v80, 0
    %v259 = vsel %vm122, %v81, 0
    %v262 = vsel %vm122, %v82, 0
    %v265 = vsel %vm122, %v83, 0
    %v268 = vsel %vm122, %v84, 0
    %v271 = vsel %vm122, %v85, 0
    %v274 = vsel %vm122, %v86, 0
    %v277 = vsel %vm122, %v87, 0
    %v280 = vsel %vm122, %v88, 0
    %v283 = vsel %vm122, %v89, 0
    %v286 = vsel %vm122, %v90, 0
    %v289 = vsel %vm122, %v91, 0
    %v292 = vsel %vm122, %v92, 0
    %v295 = vsel %vm122, %v93, 0
    %v298 = vsel %vm122, %v94, 0
    %v301 = vsel %vm122, %v95, 0
    %v304 = vsel %vm122, %v96, 0
    %v307 = vsel %vm122, %v97, 0
    %v310 = vsel %vm122, %v98, 0
    %v313 = vsel %vm122, %v99, 0
    %v316 = vsel %vm122, %v100, 0
    %v319 = vsel %vm122, %v101, 0
    %v322 = vsel %vm122, %v102, 0
    %v325 = vsel %vm122, %v103, 0
    %v328 = vsel %vm122, %v104, 0
    %v331 = vsel %vm122, %v105, 0
    %v334 = vsel %vm122, %v106, 0
    %v337 = vsel %vm122, %v107, 0
    %v340 = vsel %vm122, %v108, 0
    %v343 = vsel %vm122, %v109, 0
    %v346 = vsel %vm122, %v110, 0
    %v349 = vsel %vm122, %v111, 0
    %v352 = vsel %vm122, %v112, 0
    %v355 = vsel %vm122, %v113, 0
    %v358 = vsel %vm122, %v114, 0
    %v361 = vsel %vm122, %v115, 0
    %vm363 = vcmask 1040384
    %v365 = vsel %vm363, %v121, 0
    %367 = vmatprep.subr.mxu0 0.0
    %368 = vmatpush1.msra.mxu0 0.0
    %369 = vmatprep.subr.mxu0 0.0
    %370 = vmatpush1.msra.mxu0 0.0
    %371 = vmatprep.subr.mxu0 0.0
    %372 = vmatpush1.msra.mxu0 0.0
    %373 = vmatprep.subr.mxu0 0.0
    %374 = vmatpush1.msra.mxu0 0.0
    %375 = vmatprep.subr.mxu0 0.0
    %376 = vmatpush1.msra.mxu0 0.0
    %377 = vmatprep.subr.mxu0 0.0
    %378 = vmatpush1.msra.mxu0 0.0
    %379 = vmatprep.subr.mxu0 0.0
    %380 = vmatpush1.msra.mxu0 0.0
    %381 = vmatprep.subr.mxu0 0.0
    %382 = vmatpush1.msra.mxu0 0.0
    %383 = vmatprep.subr.mxu0 0.0
    %384 = vmatpush1.msra.mxu0 0.0
    %385 = vmatprep.subr.mxu0 0.0
    %386 = vmatpush1.msra.mxu0 0.0
    %387 = vmatprep.subr.mxu0 0.0
    %388 = vmatpush1.msra.mxu0 %v365
    %389 = vmatprep.subr.mxu0 0.0
    %390 = vmatpush1.msra.mxu0 %v120
    %391 = vmatprep.subr.mxu0 0.0
    %392 = vmatpush1.msra.mxu0 %v119
    %393 = vmatprep.subr.mxu0 0.0
    %394 = vmatpush1.msra.mxu0 %v118
    %395 = vmatprep.subr.mxu0 0.0
    %396 = vmatpush1.msra.mxu0 %v117
    %397 = vmatprep.subr.mxu0 0.0
    %398 = vmatpush1.msra.mxu0 %v116
    %399 = vmatprep.subr.mxu0 0.0
    %400 = vmatpush2.msra.mxu0 0.0
    %401 = vmatprep.subr.mxu0 0.0
    %402 = vmatpush2.msra.mxu0 0.0
    %403 = vmatprep.subr.mxu0 0.0
    %404 = vmatpush2.msra.mxu0 0.0
    %405 = vmatprep.subr.mxu0 0.0
    %406 = vmatpush2.msra.mxu0 0.0
    %407 = vmatprep.subr.mxu0 0.0
    %408 = vmatpush2.msra.mxu0 0.0
    %409 = vmatprep.subr.mxu0 0.0
    %410 = vmatpush2.msra.mxu0 0.0
    %411 = vmatprep.subr.mxu0 0.0
    %412 = vmatpush2.msra.mxu0 0.0
    %413 = vmatprep.subr.mxu0 0.0
    %414 = vmatpush2.msra.mxu0 0.0
    %415 = vmatprep.subr.mxu0 0.0
    %416 = vmatpush2.msra.mxu0 0.0
    %417 = vmatprep.subr.mxu0 0.0
    %418 = vmatpush2.msra.mxu0 0.0
    %419 = vmatprep.subr.mxu0 0.0
    %420 = vmatpush2.msra.mxu0 0.0
    %421 = vmatprep.subr.mxu0 0.0
    %422 = vmatpush2.msra.mxu0 0.0
    %423 = vmatprep.subr.mxu0 0.0
    %424 = vmatpush2.msra.mxu0 0.0
    %425 = vmatprep.subr.mxu0 0.0
    %426 = vmatpush2.msra.mxu0 0.0
    %427 = vmatprep.subr.mxu0 0.0
    %428 = vmatpush2.msra.mxu0 0.0
    %429 = vmatprep.subr.mxu0 0.0
    %430 = vmatpush2.msra.mxu0 0.0
    %431 = vmatprep.mubr.f32.mxu0 0.0
    %432 = vmatmul.mubr.f32.gmra.mxu0 %v124
    %v433 = vpop.f32.mrf.mxu0
    %v434 = vadd.f32 0.0, %v433
    %v435 = vpop.f32.mrf.mxu0
    %436 = vmatprep.mubr.f32.mxu0 0.0
    %437 = vmatmul.mubr.f32.gmra.mxu0 %v127
    %v438 = vpop.f32.mrf.mxu0
    %v439 = vadd.f32 0.0, %v438
    %v440 = vpop.f32.mrf.mxu0
    %441 = vmatprep.mubr.f32.mxu0 0.0
    %442 = vmatmul.mubr.f32.gmra.mxu0 %v130
    %v443 = vpop.f32.mrf.mxu0
    %v444 = vadd.f32 0.0, %v443
    %v445 = vpop.f32.mrf.mxu0
    %446 = vmatprep.mubr.f32.mxu0 0.0
    %447 = vmatmul.mubr.f32.gmra.mxu0 %v133
    %v448 = vpop.f32.mrf.mxu0
    %v449 = vadd.f32 0.0, %v448
    %v450 = vpop.f32.mrf.mxu0
    %451 = vmatprep.mubr.f32.mxu0 0.0
    %452 = vmatmul.mubr.f32.gmra.mxu0 %v136
    %v453 = vpop.f32.mrf.mxu0
    %v454 = vadd.f32 0.0, %v453
    %v455 = vpop.f32.mrf.mxu0
    %456 = vmatprep.mubr.f32.mxu0 0.0
    %457 = vmatmul.mubr.f32.gmra.mxu0 %v139
    %v458 = vpop.f32.mrf.mxu0
    %v459 = vadd.f32 0.0, %v458
    %v460 = vpop.f32.mrf.mxu0
    %461 = vmatprep.mubr.f32.mxu0 0.0
    %462 = vmatmul.mubr.f32.gmra.mxu0 %v142
    %v463 = vpop.f32.mrf.mxu0
    %v464 = vadd.f32 0.0, %v463
    %v465 = vpop.f32.mrf.mxu0
    %466 = vmatprep.mubr.f32.mxu0 0.0
    %467 = vmatmul.mubr.f32.gmra.mxu0 %v145
    %v468 = vpop.f32.mrf.mxu0
    %v469 = vadd.f32 0.0, %v468
    %v470 = vpop.f32.mrf.mxu0
    %471 = vmatprep.mubr.f32.mxu0 0.0
    %472 = vmatmul.mubr.f32.gmra.mxu0 %v148
    %v473 = vpop.f32.mrf.mxu0
    %v474 = vadd.f32 0.0, %v473
    %v475 = vpop.f32.mrf.mxu0
    %476 = vmatprep.mubr.f32.mxu0 0.0
    %477 = vmatmul.mubr.f32.gmra.mxu0 %v151
    %v478 = vpop.f32.mrf.mxu0
    %v479 = vadd.f32 0.0, %v478
    %v480 = vpop.f32.mrf.mxu0
    %481 = vmatprep.mubr.f32.mxu0 0.0
    %482 = vmatmul.mubr.f32.gmra.mxu0 %v154
    %v483 = vpop.f32.mrf.mxu0
    %v484 = vadd.f32 0.0, %v483
    %v485 = vpop.f32.mrf.mxu0
    %486 = vmatprep.mubr.f32.mxu0 0.0
    %487 = vmatmul.mubr.f32.gmra.mxu0 %v157
    %v488 = vpop.f32.mrf.mxu0
    %v489 = vadd.f32 0.0, %v488
    %v490 = vpop.f32.mrf.mxu0
    %491 = vmatprep.mubr.f32.mxu0 0.0
    %492 = vmatmul.mubr.f32.gmra.mxu0 %v160
    %v493 = vpop.f32.mrf.mxu0
    %v494 = vadd.f32 0.0, %v493
    %v495 = vpop.f32.mrf.mxu0
    %496 = vmatprep.mubr.f32.mxu0 0.0
    %497 = vmatmul.mubr.f32.gmra.mxu0 %v163
    %v498 = vpop.f32.mrf.mxu0
    %v499 = vadd.f32 0.0, %v498
    %v500 = vpop.f32.mrf.mxu0
    %501 = vmatprep.mubr.f32.mxu0 0.0
    %502 = vmatmul.mubr.f32.gmra.mxu0 %v166
    %v503 = vpop.f32.mrf.mxu0
    %v504 = vadd.f32 0.0, %v503
    %v505 = vpop.f32.mrf.mxu0
    %506 = vmatprep.mubr.f32.mxu0 0.0
    %507 = vmatmul.mubr.f32.gmra.mxu0 %v169
    %v508 = vpop.f32.mrf.mxu0
    %v509 = vadd.f32 0.0, %v508
    %v510 = vpop.f32.mrf.mxu0
    %511 = vmatprep.mubr.f32.mxu0 0.0
    %512 = vmatmul.mubr.f32.gmra.mxu0 %v172
    %v513 = vpop.f32.mrf.mxu0
    %v514 = vadd.f32 0.0, %v513
    %v515 = vpop.f32.mrf.mxu0
    %516 = vmatprep.mubr.f32.mxu0 0.0
    %517 = vmatmul.mubr.f32.gmra.mxu0 %v175
    %v518 = vpop.f32.mrf.mxu0
    %v519 = vadd.f32 0.0, %v518
    %v520 = vpop.f32.mrf.mxu0
    %521 = vmatprep.mubr.f32.mxu0 0.0
    %522 = vmatmul.mubr.f32.gmra.mxu0 %v178
    %v523 = vpop.f32.mrf.mxu0
    %v524 = vadd.f32 0.0, %v523
    %v525 = vpop.f32.mrf.mxu0
    %526 = vmatprep.mubr.f32.mxu0 0.0
    %527 = vmatmul.mubr.f32.gmra.mxu0 %v181
    %v528 = vpop.f32.mrf.mxu0
    %v529 = vadd.f32 0.0, %v528
    %v530 = vpop.f32.mrf.mxu0
    %531 = vmatprep.mubr.f32.mxu0 0.0
    %532 = vmatmul.mubr.f32.gmra.mxu0 %v184
    %v533 = vpop.f32.mrf.mxu0
    %v534 = vadd.f32 0.0, %v533
    %v535 = vpop.f32.mrf.mxu0
    %536 = vmatprep.mubr.f32.mxu0 0.0
    %537 = vmatmul.mubr.f32.gmra.mxu0 %v187
    %v538 = vpop.f32.mrf.mxu0
    %v539 = vadd.f32 0.0, %v538
    %v540 = vpop.f32.mrf.mxu0
    %541 = vmatprep.mubr.f32.mxu0 0.0
    %542 = vmatmul.mubr.f32.gmra.mxu0 %v190
    %v543 = vpop.f32.mrf.mxu0
    %v544 = vadd.f32 0.0, %v543
    %v545 = vpop.f32.mrf.mxu0
    %546 = vmatprep.mubr.f32.mxu0 0.0
    %547 = vmatmul.mubr.f32.gmra.mxu0 %v193
    %v548 = vpop.f32.mrf.mxu0
    %v549 = vadd.f32 0.0, %v548
    %v550 = vpop.f32.mrf.mxu0
    %551 = vmatprep.mubr.f32.mxu0 0.0
    %552 = vmatmul.mubr.f32.gmra.mxu0 %v196
    %v553 = vpop.f32.mrf.mxu0
    %v554 = vadd.f32 0.0, %v553
    %v555 = vpop.f32.mrf.mxu0
    %556 = vmatprep.mubr.f32.mxu0 0.0
    %557 = vmatmul.mubr.f32.gmra.mxu0 %v199
    %v558 = vpop.f32.mrf.mxu0
    %v559 = vadd.f32 0.0, %v558
    %v560 = vpop.f32.mrf.mxu0
    %561 = vmatprep.mubr.f32.mxu0 0.0
    %562 = vmatmul.mubr.f32.gmra.mxu0 %v202
    %v563 = vpop.f32.mrf.mxu0
    %v564 = vadd.f32 0.0, %v563
    %v565 = vpop.f32.mrf.mxu0
    %566 = vmatprep.mubr.f32.mxu0 0.0
    %567 = vmatmul.mubr.f32.gmra.mxu0 %v205
    %v568 = vpop.f32.mrf.mxu0
    %v569 = vadd.f32 0.0, %v568
    %v570 = vpop.f32.mrf.mxu0
    %571 = vmatprep.mubr.f32.mxu0 0.0
    %572 = vmatmul.mubr.f32.gmra.mxu0 %v208
    %v573 = vpop.f32.mrf.mxu0
    %v574 = vadd.f32 0.0, %v573
    %v575 = vpop.f32.mrf.mxu0
    %576 = vmatprep.mubr.f32.mxu0 0.0
    %577 = vmatmul.mubr.f32.gmra.mxu0 %v211
    %v578 = vpop.f32.mrf.mxu0
    %v579 = vadd.f32 0.0, %v578
    %v580 = vpop.f32.mrf.mxu0
    %581 = vmatprep.mubr.f32.mxu0 0.0
    %582 = vmatmul.mubr.f32.gmra.mxu0 %v214
    %v583 = vpop.f32.mrf.mxu0
    %v584 = vadd.f32 0.0, %v583
    %v585 = vpop.f32.mrf.mxu0
    %586 = vmatprep.mubr.f32.mxu0 0.0
    %587 = vmatmul.mubr.f32.gmra.mxu0 %v217
    %v588 = vpop.f32.mrf.mxu0
    %v589 = vadd.f32 0.0, %v588
    %v590 = vpop.f32.mrf.mxu0
    %591 = vmatprep.mubr.f32.mxu0 0.0
    %592 = vmatmul.mubr.f32.gmra.mxu0 %v220
    %v593 = vpop.f32.mrf.mxu0
    %v594 = vadd.f32 0.0, %v593
    %v595 = vpop.f32.mrf.mxu0
    %596 = vmatprep.mubr.f32.mxu0 0.0
    %597 = vmatmul.mubr.f32.gmra.mxu0 %v223
    %v598 = vpop.f32.mrf.mxu0
    %v599 = vadd.f32 0.0, %v598
    %v600 = vpop.f32.mrf.mxu0
    %601 = vmatprep.mubr.f32.mxu0 0.0
    %602 = vmatmul.mubr.f32.gmra.mxu0 %v226
    %v603 = vpop.f32.mrf.mxu0
    %v604 = vadd.f32 0.0, %v603
    %v605 = vpop.f32.mrf.mxu0
    %606 = vmatprep.mubr.f32.mxu0 0.0
    %607 = vmatmul.mubr.f32.gmra.mxu0 %v229
    %v608 = vpop.f32.mrf.mxu0
    %v609 = vadd.f32 0.0, %v608
    %v610 = vpop.f32.mrf.mxu0
    %611 = vmatprep.mubr.f32.mxu0 0.0
    %612 = vmatmul.mubr.f32.gmra.mxu0 %v232
    %v613 = vpop.f32.mrf.mxu0
    %v614 = vadd.f32 0.0, %v613
    %v615 = vpop.f32.mrf.mxu0
    %616 = vmatprep.mubr.f32.mxu0 0.0
    %617 = vmatmul.mubr.f32.gmra.mxu0 %v235
    %v618 = vpop.f32.mrf.mxu0
    %v619 = vadd.f32 0.0, %v618
    %v620 = vpop.f32.mrf.mxu0
    %621 = vmatprep.mubr.f32.mxu0 0.0
    %622 = vmatmul.mubr.f32.gmra.mxu0 %v238
    %v623 = vpop.f32.mrf.mxu0
    %v624 = vadd.f32 0.0, %v623
    %v625 = vpop.f32.mrf.mxu0
    %626 = vmatprep.mubr.f32.mxu0 0.0
    %627 = vmatmul.mubr.f32.gmra.mxu0 %v241
    %v628 = vpop.f32.mrf.mxu0
    %v629 = vadd.f32 0.0, %v628
    %v630 = vpop.f32.mrf.mxu0
    %631 = vmatprep.mubr.f32.mxu0 0.0
    %632 = vmatmul.mubr.f32.gmra.mxu0 %v244
    %v633 = vpop.f32.mrf.mxu0
    %v634 = vadd.f32 0.0, %v633
    %v635 = vpop.f32.mrf.mxu0
    %636 = vmatprep.mubr.f32.mxu0 0.0
    %637 = vmatmul.mubr.f32.gmra.mxu0 %v247
    %v638 = vpop.f32.mrf.mxu0
    %v639 = vadd.f32 0.0, %v638
    %v640 = vpop.f32.mrf.mxu0
    %641 = vmatprep.mubr.f32.mxu0 0.0
    %642 = vmatmul.mubr.f32.gmra.mxu0 %v250
    %v643 = vpop.f32.mrf.mxu0
    %v644 = vadd.f32 0.0, %v643
    %v645 = vpop.f32.mrf.mxu0
    %646 = vmatprep.mubr.f32.mxu0 0.0
    %647 = vmatmul.mubr.f32.gmra.mxu0 %v253
    %v648 = vpop.f32.mrf.mxu0
    %v649 = vadd.f32 0.0, %v648
    %v650 = vpop.f32.mrf.mxu0
    %651 = vmatprep.mubr.f32.mxu0 0.0
    %652 = vmatmul.mubr.f32.gmra.mxu0 %v256
    %v653 = vpop.f32.mrf.mxu0
    %v654 = vpop.f32.mrf.mxu0
    %655 = vmatprep.mubr.f32.mxu0 0.0
    %656 = vmatmul.mubr.f32.gmra.mxu0 %v259
    %v657 = vpop.f32.mrf.mxu0
    %v658 = vpop.f32.mrf.mxu0
    %659 = vmatprep.mubr.f32.mxu0 0.0
    %660 = vmatmul.mubr.f32.gmra.mxu0 %v262
    %v661 = vpop.f32.mrf.mxu0
    %v662 = vpop.f32.mrf.mxu0
    %663 = vmatprep.mubr.f32.mxu0 0.0
    %664 = vmatmul.mubr.f32.gmra.mxu0 %v265
    %v665 = vpop.f32.mrf.mxu0
    %v666 = vpop.f32.mrf.mxu0
    %667 = vmatprep.mubr.f32.mxu0 0.0
    %668 = vmatmul.mubr.f32.gmra.mxu0 %v268
    %v669 = vpop.f32.mrf.mxu0
    %v670 = vadd.f32 0.0, %v669
    %v671 = vpop.f32.mrf.mxu0
    %672 = vmatprep.mubr.f32.mxu0 0.0
    %673 = vmatmul.mubr.f32.gmra.mxu0 %v271
    %v674 = vpop.f32.mrf.mxu0
    %v675 = vadd.f32 0.0, %v674
    %v676 = vpop.f32.mrf.mxu0
    %677 = vmatprep.mubr.f32.mxu0 0.0
    %678 = vmatmul.mubr.f32.gmra.mxu0 %v274
    %v679 = vpop.f32.mrf.mxu0
    %v680 = vadd.f32 0.0, %v679
    %v681 = vpop.f32.mrf.mxu0
    %682 = vmatprep.mubr.f32.mxu0 0.0
    %683 = vmatmul.mubr.f32.gmra.mxu0 %v277
    %v684 = vpop.f32.mrf.mxu0
    %v685 = vadd.f32 0.0, %v684
    %v686 = vpop.f32.mrf.mxu0
    %687 = vmatprep.mubr.f32.mxu0 0.0
    %688 = vmatmul.mubr.f32.gmra.mxu0 %v280
    %v689 = vpop.f32.mrf.mxu0
    %v690 = vadd.f32 0.0, %v689
    %v691 = vpop.f32.mrf.mxu0
    %692 = vmatprep.mubr.f32.mxu0 0.0
    %693 = vmatmul.mubr.f32.gmra.mxu0 %v283
    %v694 = vpop.f32.mrf.mxu0
    %v695 = vadd.f32 0.0, %v694
    %v696 = vpop.f32.mrf.mxu0
    %697 = vmatprep.mubr.f32.mxu0 0.0
    %698 = vmatmul.mubr.f32.gmra.mxu0 %v286
    %v699 = vpop.f32.mrf.mxu0
    %v700 = vadd.f32 0.0, %v699
    %v701 = vpop.f32.mrf.mxu0
    %702 = vmatprep.mubr.f32.mxu0 0.0
    %703 = vmatmul.mubr.f32.gmra.mxu0 %v289
    %v704 = vpop.f32.mrf.mxu0
    %v705 = vadd.f32 0.0, %v704
    %v706 = vpop.f32.mrf.mxu0
    %707 = vmatprep.mubr.f32.mxu0 0.0
    %708 = vmatmul.mubr.f32.gmra.mxu0 %v292
    %v709 = vpop.f32.mrf.mxu0
    %v710 = vadd.f32 0.0, %v709
    %v711 = vpop.f32.mrf.mxu0
    %712 = vmatprep.mubr.f32.mxu0 0.0
    %713 = vmatmul.mubr.f32.gmra.mxu0 %v295
    %v714 = vpop.f32.mrf.mxu0
    %v715 = vadd.f32 0.0, %v714
    %v716 = vpop.f32.mrf.mxu0
    %717 = vmatprep.mubr.f32.mxu0 0.0
    %718 = vmatmul.mubr.f32.gmra.mxu0 %v298
    %v719 = vpop.f32.mrf.mxu0
    %v720 = vadd.f32 0.0, %v719
    %v721 = vpop.f32.mrf.mxu0
    %722 = vmatprep.mubr.f32.mxu0 0.0
    %723 = vmatmul.mubr.f32.gmra.mxu0 %v301
    %v724 = vpop.f32.mrf.mxu0
    %v725 = vadd.f32 0.0, %v724
    %v726 = vpop.f32.mrf.mxu0
    %727 = vmatprep.mubr.f32.mxu0 0.0
    %728 = vmatmul.mubr.f32.gmra.mxu0 %v304
    %v729 = vpop.f32.mrf.mxu0
    %v730 = vadd.f32 0.0, %v729
    %v731 = vpop.f32.mrf.mxu0
    %732 = vmatprep.mubr.f32.mxu0 0.0
    %733 = vmatmul.mubr.f32.gmra.mxu0 %v307
    %v734 = vpop.f32.mrf.mxu0
    %v735 = vadd.f32 0.0, %v734
    %v736 = vpop.f32.mrf.mxu0
    %737 = vmatprep.mubr.f32.mxu0 0.0
    %738 = vmatmul.mubr.f32.gmra.mxu0 %v310
    %v739 = vpop.f32.mrf.mxu0
    %v740 = vadd.f32 0.0, %v739
    %v741 = vpop.f32.mrf.mxu0
    %742 = vmatprep.mubr.f32.mxu0 0.0
    %743 = vmatmul.mubr.f32.gmra.mxu0 %v313
    %v744 = vpop.f32.mrf.mxu0
    %v745 = vadd.f32 0.0, %v744
    %v746 = vpop.f32.mrf.mxu0
    %747 = vmatprep.mubr.f32.mxu0 0.0
    %748 = vmatmul.mubr.f32.gmra.mxu0 %v316
    %v749 = vpop.f32.mrf.mxu0
    %v750 = vadd.f32 0.0, %v749
    %v751 = vpop.f32.mrf.mxu0
    %752 = vmatprep.mubr.f32.mxu0 0.0
    %753 = vmatmul.mubr.f32.gmra.mxu0 %v319
    %v754 = vpop.f32.mrf.mxu0
    %v755 = vadd.f32 0.0, %v754
    %v756 = vpop.f32.mrf.mxu0
    %757 = vmatprep.mubr.f32.mxu0 0.0
    %758 = vmatmul.mubr.f32.gmra.mxu0 %v322
    %v759 = vpop.f32.mrf.mxu0
    %v760 = vadd.f32 0.0, %v759
    %v761 = vpop.f32.mrf.mxu0
    %762 = vmatprep.mubr.f32.mxu0 0.0
    %763 = vmatmul.mubr.f32.gmra.mxu0 %v325
    %v764 = vpop.f32.mrf.mxu0
    %v765 = vadd.f32 0.0, %v764
    %v766 = vpop.f32.mrf.mxu0
    %767 = vmatprep.mubr.f32.mxu0 0.0
    %768 = vmatmul.mubr.f32.gmra.mxu0 %v328
    %v769 = vpop.f32.mrf.mxu0
    %v770 = vadd.f32 0.0, %v769
    %v771 = vpop.f32.mrf.mxu0
    %772 = vmatprep.mubr.f32.mxu0 0.0
    %773 = vmatmul.mubr.f32.gmra.mxu0 %v331
    %v774 = vpop.f32.mrf.mxu0
    %v775 = vadd.f32 0.0, %v774
    %v776 = vpop.f32.mrf.mxu0
    %777 = vmatprep.mubr.f32.mxu0 0.0
    %778 = vmatmul.mubr.f32.gmra.mxu0 %v334
    %v779 = vpop.f32.mrf.mxu0
    %v780 = vadd.f32 0.0, %v779
    %v781 = vpop.f32.mrf.mxu0
    %782 = vmatprep.mubr.f32.mxu0 0.0
    %783 = vmatmul.mubr.f32.gmra.mxu0 %v337
    %v784 = vpop.f32.mrf.mxu0
    %v785 = vadd.f32 0.0, %v784
    %v786 = vpop.f32.mrf.mxu0
    %787 = vmatprep.mubr.f32.mxu0 0.0
    %788 = vmatmul.mubr.f32.gmra.mxu0 %v340
    %v789 = vpop.f32.mrf.mxu0
    %v790 = vadd.f32 0.0, %v789
    %v791 = vpop.f32.mrf.mxu0
    %792 = vmatprep.mubr.f32.mxu0 0.0
    %793 = vmatmul.mubr.f32.gmra.mxu0 %v343
    %v794 = vpop.f32.mrf.mxu0
    %v795 = vadd.f32 0.0, %v794
    %v796 = vpop.f32.mrf.mxu0
    %797 = vmatprep.mubr.f32.mxu0 0.0
    %798 = vmatmul.mubr.f32.gmra.mxu0 %v346
    %v799 = vpop.f32.mrf.mxu0
    %v800 = vadd.f32 0.0, %v799
    %v801 = vpop.f32.mrf.mxu0
    %802 = vmatprep.mubr.f32.mxu0 0.0
    %803 = vmatmul.mubr.f32.gmra.mxu0 %v349
    %v804 = vpop.f32.mrf.mxu0
    %v805 = vadd.f32 0.0, %v804
    %v806 = vpop.f32.mrf.mxu0
    %807 = vmatprep.mubr.f32.mxu0 0.0
    %808 = vmatmul.mubr.f32.gmra.mxu0 %v352
    %v809 = vpop.f32.mrf.mxu0
    %v810 = vadd.f32 0.0, %v809
    %v811 = vpop.f32.mrf.mxu0
    %812 = vmatprep.mubr.f32.mxu0 0.0
    %813 = vmatmul.mubr.f32.gmra.mxu0 %v355
    %v814 = vpop.f32.mrf.mxu0
    %v815 = vadd.f32 0.0, %v814
    %v816 = vpop.f32.mrf.mxu0
    %817 = vmatprep.mubr.f32.mxu0 0.0
    %818 = vmatmul.mubr.f32.gmra.mxu0 %v358
    %v819 = vpop.f32.mrf.mxu0
    %v820 = vadd.f32 0.0, %v819
    %v821 = vpop.f32.mrf.mxu0
    %822 = vmatprep.mubr.f32.mxu0 0.0
    %823 = vmatmul.mubr.f32.gmra.mxu0 %v361
    %v824 = vpop.f32.mrf.mxu0
    %v825 = vadd.f32 0.0, %v824
    %v826 = vpop.f32.mrf.mxu0
    %827 = vdwg.mxu0
    %v828 = vand.u32 2147483647, %v434
    %v829 = vand.u32 2147483647, %v439
    %v830 = vand.u32 2147483647, %v444
    %v831 = vand.u32 2147483647, %v449
    %v832 = vand.u32 2147483647, %v454
    %v833 = vand.u32 2147483647, %v459
    %v834 = vand.u32 2147483647, %v464
    %v835 = vand.u32 2147483647, %v469
    %v836 = vand.u32 2147483647, %v474
    %v837 = vand.u32 2147483647, %v479
    %v838 = vand.u32 2147483647, %v484
    %v839 = vand.u32 2147483647, %v489
    %v840 = vand.u32 2147483647, %v494
    %v841 = vand.u32 2147483647, %v499
    %v842 = vand.u32 2147483647, %v504
    %v843 = vand.u32 2147483647, %v509
    %v844 = vand.u32 2147483647, %v514
    %v845 = vand.u32 2147483647, %v519
    %v846 = vand.u32 2147483647, %v524
    %v847 = vand.u32 2147483647, %v529
    %v848 = vand.u32 2147483647, %v534
    %v849 = vand.u32 2147483647, %v539
    %v850 = vand.u32 2147483647, %v544
    %v851 = vand.u32 2147483647, %v549
    %v852 = vand.u32 2147483647, %v554
    %v853 = vand.u32 2147483647, %v559
    %v854 = vand.u32 2147483647, %v564
    %v855 = vand.u32 2147483647, %v569
    %v856 = vand.u32 2147483647, %v574
    %v857 = vand.u32 2147483647, %v579
    %v858 = vand.u32 2147483647, %v584
    %v859 = vand.u32 2147483647, %v589
    %v860 = vand.u32 2147483647, %v614
    %v861 = vand.u32 2147483647, %v619
    %v862 = vand.u32 2147483647, %v624
    %v863 = vand.u32 2147483647, %v629
    %v864 = vmax.f32 %v634, 0.0
    %v865 = vmax.f32 %v639, 0.0
    %v866 = vmax.f32 %v644, 0.0
    %v867 = vmax.f32 %v649, 0.0
    %v868 = vmul.f32 %v670, %v828
    %v869 = vmul.f32 %v675, %v829
    %v870 = vmul.f32 %v680, %v830
    %v871 = vmul.f32 %v685, %v831
    %v872 = vmul.f32 %v690, %v832
    %v873 = vmul.f32 %v695, %v833
    %v874 = vmul.f32 %v700, %v834
    %v875 = vmul.f32 %v705, %v835
    %v876 = vmul.f32 %v710, %v836
    %v877 = vmul.f32 %v715, %v837
    %v878 = vmul.f32 %v720, %v838
    %v879 = vmul.f32 %v725, %v839
    %v880 = vmul.f32 %v730, %v840
    %v881 = vmul.f32 %v735, %v841
    %v882 = vmul.f32 %v740, %v842
    %v883 = vmul.f32 %v745, %v843
    %v884 = vmul.f32 %v750, %v844
    %v885 = vmul.f32 %v755, %v845
    %v886 = vmul.f32 %v760, %v846
    %v887 = vmul.f32 %v765, %v847
    %v888 = vmul.f32 %v770, %v848
    %v889 = vmul.f32 %v775, %v849
    %v890 = vmul.f32 %v780, %v850
    %v891 = vmul.f32 %v785, %v851
    %v892 = vmul.f32 %v790, %v852
    %v893 = vmul.f32 %v795, %v853
    %v894 = vmul.f32 %v800, %v854
    %v895 = vmul.f32 %v805, %v855
    %v896 = vmul.f32 %v810, %v856
    %v897 = vmul.f32 %v815, %v857
    %v898 = vmul.f32 %v820, %v858
    %v899 = vmul.f32 %v825, %v859
    %v900 = vadd.f32 %v868, %v872
    %v901 = vadd.f32 %v869, %v873
    %v902 = vadd.f32 %v870, %v874
    %v903 = vadd.f32 %v871, %v875
    %v904 = vadd.f32 %v900, %v876
    %v905 = vadd.f32 %v901, %v877
    %v906 = vadd.f32 %v902, %v878
    %v907 = vadd.f32 %v903, %v879
    %v908 = vadd.f32 %v904, %v880
    %v909 = vadd.f32 %v905, %v881
    %v910 = vadd.f32 %v906, %v882
    %v911 = vadd.f32 %v907, %v883
    %v912 = vadd.f32 %v908, %v884
    %v913 = vadd.f32 %v909, %v885
    %v914 = vadd.f32 %v910, %v886
    %v915 = vadd.f32 %v911, %v887
    %v916 = vadd.f32 %v912, %v888
    %v917 = vadd.f32 %v913, %v889
    %v918 = vadd.f32 %v914, %v890
    %v919 = vadd.f32 %v915, %v891
    %v920 = vadd.f32 %v916, %v892
    %v921 = vadd.f32 %v917, %v893
    %v922 = vadd.f32 %v918, %v894
    %v923 = vadd.f32 %v919, %v895
    %v924 = vadd.f32 %v920, %v896
    %v925 = vadd.f32 %v921, %v897
    %v926 = vadd.f32 %v922, %v898
    %v927 = vadd.f32 %v923, %v899
    %v928 = vadd.f32 %v924, %v594
    %v929 = vadd.f32 %v925, %v599
    %v930 = vadd.f32 %v926, %v604
    %v931 = vadd.f32 %v927, %v609
    %vm932 = vcmp.gt.f32.partialorder %v928, 0.0
    %vm933 = vcmp.gt.f32.partialorder %v929, 0.0
    %vm934 = vcmp.gt.f32.partialorder %v930, 0.0
    %vm935 = vcmp.gt.f32.partialorder %v931, 0.0
    %v936 = vmin.f32 %v928, 0.0
    %v937 = vmin.f32 %v929, 0.0
    %v938 = vmin.f32 %v930, 0.0
    %v939 = vmin.f32 %v931, 0.0
    %v940 = vmul.f32 %v936, 1.442695
    %v941 = vpow.pop %v940
    %v942 = vmul.f32 %v937, 1.442695
    %v943 = vpow.pop %v942
    %v944 = vmul.f32 %v938, 1.442695
    %v945 = vpow.pop %v944
    %v946 = vmul.f32 %v939, 1.442695
    %v947 = vpow.pop %v946
    %v948 = vsub.f32 %v941, 1.0
    %v949 = vsub.f32 %v943, 1.0
    %v950 = vsub.f32 %v945, 1.0
    %v951 = vsub.f32 %v947, 1.0
    %v952 = vsel %vm932, %v928, %v948
    %v953 = vsel %vm933, %v929, %v949
    %v954 = vsel %vm934, %v930, %v950
    %v955 = vsel %vm935, %v931, %v951
    %v956 = vmul.f32 %v952, %v860
    %v957 = vmul.f32 %v953, %v861
    %v958 = vmul.f32 %v954, %v862
    %v959 = vmul.f32 %v955, %v863
    %v960 = vld [vmem:[%s3] sm:$0xff]
    %v961 = vld [vmem:[%s3 + $0x8] sm:$0xff]
    %v962 = vld [vmem:[%s3 + $0x10] sm:$0xff]
    %v963 = vld [vmem:[%s3 + $0x18] sm:$0xff]
    %965 = vset.pattern.permute.xlu0 0
    %966 = vperm.xlu0 %965, %v960
    %v967 = vpop.permute.xlu0 %966
    %970 = vset.pattern.permute.xlu0 0
    %971 = vperm.xlu0 %970, %v961
    %v972 = vpop.permute.xlu0 %971
    %975 = vset.pattern.permute.xlu0 0
    %976 = vperm.xlu0 %975, %v962
    %v977 = vpop.permute.xlu0 %976
    %980 = vset.pattern.permute.xlu0 0
    %981 = vperm.xlu0 %980, %v963
    %v982 = vpop.permute.xlu0 %981
    %v984 = vmul.f32 %v864, %v967
    %v985 = vmul.f32 %v865, %v972
    %v986 = vmul.f32 %v866, %v977
    %v987 = vmul.f32 %v867, %v982
    %v988 = vadd.f32 %v956, %v984
    %v989 = vadd.f32 %v957, %v985
    %v990 = vadd.f32 %v958, %v986
    %v991 = vadd.f32 %v959, %v987
    %v992 = vsel %vm27, %v988, 0.0
    %v993 = vsel %vm27, %v989, 0.0
    %v994 = vadd.f32 %v992, %v993
    %v995 = vsel %vm27, %v990, 0.0
    %v996 = vadd.f32 %v994, %v995
    %v997 = vsel %vm27, %v991, 0.0
    %v998 = vadd.f32 %v996, %v997
    %v999 = vrot.slane %v998, 4
    %v1000 = vadd.f32 %v998, %v999
    %v1001 = vrot.slane %v1000, 2
    %v1002 = vadd.f32 %v1000, %v1001
    %v1003 = vrot.slane %v1002, 1
    %v1004 = vadd.f32 %v1002, %v1003
    %v1005 = vld [vmem:[#allocation3] sm:$0x1]
    %1007 = vset.pattern.permute.xlu0 0
    %1008 = vperm.xlu0 %1007, %v1005
    %v1009 = vpop.permute.xlu0 %1008
    %v1011 = vlaneseq
    %v1012 = vshrl.u32 %v1011, 7
    %v1013 = vsub.s32 0, %v1012
    %v1014 = vrot.slane %v1009, %v1013
    %v1015 = vadd.f32 %v1004, %v1014
    %1016 = vst.msk [vmem:[#allocation4] sm:$0x1] %vm34, %v1015
    // Predicated region
    $region22: #{tpu_custom_call.1} parent=1 // pred_check
      _
    $region23: #{tpu_custom_call.1} parent=1 // pred_check_branch
      %1018 = sbr.rel (0) target = $region25
    $region24: #{tpu_custom_call.1} parent=1 // pred_region
      %s1020 = ssub.s32 16, 16
      %1021 = vsyncadd [#allocation5], %s1020
      %s1023 = sshll.u32 [#allocation4], 4
      %s1024 = int_to_ptr.vmem [resolvable:$true] %s1023
      %1026 = dma.vmem_to_hbm [thread:$0]  %s1024, 16, %s5, [#allocation5]
    $region25: #{tpu_custom_call.1} parent=1 // pred_fallthru
      _
    // Predicated region
    $region26: #{tpu_custom_call.1} parent=1 // pred_check
      _
    $region27: #{tpu_custom_call.1} parent=1 // pred_check_branch
      %1028 = sbr.rel (0) target = $region29
    $region28: #{tpu_custom_call.1} parent=1 // pred_region
      %1029 = dma.done [#allocation5], 16
    $region29: #{tpu_custom_call.1} parent=1 // pred_fallthru
      _
    %1030 = vsyncpa [#allocation5], 1

</llo_original>
